<compile_context>
chip_gen: v5e
topology: v5e:2x2
jax: 0.10.0
libtpu: 0.0.40
codegen_flags: <defaults>
</compile_context>

<pallas_src>
import functools
import math

import jax
import jax.numpy as jnp
from jax import lax
from jax.experimental import pallas as pl
from jax.experimental.pallas import tpu as pltpu


# Safe scoped-VMEM limit on all generations (<= 64 MiB physical on v7x,
# well under 128 MiB on v5e/v6e, above the 32 MiB v6e default scoped limit).
VMEM_LIMIT_BYTES = 64 * 1024 * 1024


# ----------------------------------------------------------------------------
# Tiled linear kernel:  y = x @ W_t + b      (W_t is the PyTorch weight,
#   pre-transposed once to [Din, Dout] in prepare_params)
#   x: [M, Din], W_t: [Din, Dout], b: [1, Dout]
#   grid = (M/tm, Dout/tn, Din/tk), reduction (k) axis last.
# ----------------------------------------------------------------------------
def _linear_kernel(x_ref, w_ref, b_ref, o_ref, acc_ref):
    k = pl.program_id(2)

    @pl.when(k == 0)
    def _():
        acc_ref[...] = jnp.zeros_like(acc_ref)

    # Plain [tm,tk] @ [tk,tn] contraction -> no transpose on the MXU feed path.
    acc_ref[...] += jnp.dot(
        x_ref[...], w_ref[...], preferred_element_type=jnp.float32
    )

    # Bias added once, on the final reduction step (f32, then cast out).
    @pl.when(k == pl.num_programs(2) - 1)
    def _():
        o_ref[...] = (acc_ref[...] + b_ref[...].astype(jnp.float32)).astype(
            o_ref.dtype
        )


def _sublane_align(dtype):
    """Dtype-aware sublane alignment: 8 (f32) / 16 (bf16) / 32 (int8)."""
    return {4: 8, 2: 16, 1: 32}.get(jnp.dtype(dtype).itemsize, 8)


def _pick_tile(dim, target, align):
    """Largest tile <= target that divides `dim` and respects alignment.

    Falls back to the full dim (a full-extent block is always legal)."""
    if dim <= target:
        return dim
    for t in range(target, 0, -1):
        if dim % t == 0 and t % align == 0:
            return t
    return dim


def pallas_linear(x, w_t, b, *, out_dtype=None,
                  tm_target=512, tn_target=512, tk_target=1024):
    """x: [M, Din], w_t: [Din, Dout] (pre-transposed), b: [Dout] -> [M, Dout]."""
    M, Din = x.shape
    Dout = w_t.shape[1]
    out_dtype = x.dtype if out_dtype is None else out_dtype

    tm = _pick_tile(M, tm_target, _sublane_align(x.dtype))   # sublane of x/out
    tn = _pick_tile(Dout, tn_target, 128)                    # lane of out/w
    tk = _pick_tile(Din, tk_target, 128)                     # contracted dim
    grid = (M // tm, Dout // tn, Din // tk)

    return pl.pallas_call(
        _linear_kernel,
        out_shape=jax.ShapeDtypeStruct((M, Dout), out_dtype),
        grid_spec=pltpu.PrefetchScalarGridSpec(
            num_scalar_prefetch=0,
            grid=grid,
            in_specs=[
                pl.BlockSpec((tm, tk), lambda i, j, k: (i, k)),
                pl.BlockSpec((tk, tn), lambda i, j, k: (k, j)),
                pl.BlockSpec((1, tn), lambda i, j, k: (0, j)),
            ],
            out_specs=pl.BlockSpec((tm, tn), lambda i, j, k: (i, j)),
            scratch_shapes=[pltpu.VMEM((tm, tn), jnp.float32)],
        ),
        compiler_params=pltpu.CompilerParams(
            dimension_semantics=("parallel", "parallel", "arbitrary"),
            vmem_limit_bytes=VMEM_LIMIT_BYTES,
        ),
    )(x, w_t, b.reshape(1, Dout))


# ----------------------------------------------------------------------------
# Scaled dot-product attention kernel.
#   One grid step per batch element; heads handled in-kernel from the natural
#   [S, h*d_k] layout (static lane slices).  The 1/sqrt(d_k) scale is folded
#   into the Q projection, so nothing is rescaled here.  Context is written
#   lane-dense into a [S, h*d_k] output block (no HBM merge transpose).
# ----------------------------------------------------------------------------
def _attention_body(q, k, v, o_ref, p_ref, *, h, d_k):
    for hd in range(h):  # static unrolled loop over heads
        lo = hd * d_k
        qh = q[:, lo:lo + d_k]
        kh = k[:, lo:lo + d_k]
        vh = v[:, lo:lo + d_k]

        # scores = qh @ kh^T without materializing a transpose; f32 accumulate.
        s = lax.dot_general(
            qh, kh,
            dimension_numbers=(((1,), (1,)), ((), ())),
            preferred_element_type=jnp.float32,
        )

        # Numerically-stable softmax (f32 stats). approx=True would use a free
        # EUP slot, but exact reciprocal keeps the f32-path parity check tight.
        m = jnp.max(s, axis=-1, keepdims=True)
        e = jnp.exp(s - m)
        denom = jnp.sum(e, axis=-1, keepdims=True)
        p = e * pl.reciprocal(denom, approx=False)

        p_ref[0, hd] = p.astype(p_ref.dtype)
        # Lane-dense context store: per-head static lane slice of [S, h*d_k].
        o_ref[0, :, lo:lo + d_k] = jnp.dot(
            p.astype(vh.dtype), vh, preferred_element_type=jnp.float32
        ).astype(o_ref.dtype)


def _attention_kernel(q_ref, k_ref, v_ref, o_ref, p_ref, *, h, d_k):
    _attention_body(q_ref[0], k_ref[0], v_ref[0], o_ref, p_ref, h=h, d_k=d_k)


def _attention_kernel_fused(qkv_ref, o_ref, p_ref, *, h, d_k):
    # Fused self-attention path: one [S, 3*d_model] block, sliced in VMEM.
    qkv = qkv_ref[0]
    d_model = h * d_k
    _attention_body(
        qkv[:, 0 * d_model:1 * d_model],
        qkv[:, 1 * d_model:2 * d_model],
        qkv[:, 2 * d_model:3 * d_model],
        o_ref, p_ref, h=h, d_k=d_k,
    )


def _attention_call(kern, inputs, B, S, d_model, h, in_specs, out_dtype,
                    probs_dtype):
    return pl.pallas_call(
        kern,
        out_shape=(
            jax.ShapeDtypeStruct((B, S, d_model), out_dtype),     # lane-dense ctx
            jax.ShapeDtypeStruct((B, h, S, S), probs_dtype),      # attention probs
        ),
        grid=(B,),
        in_specs=in_specs,
        out_specs=(
            pl.BlockSpec((1, S, d_model), lambda b: (b, 0, 0)),
            pl.BlockSpec((1, h, S, S), lambda b: (b, 0, 0, 0)),
        ),
        compiler_params=pltpu.CompilerParams(
            dimension_semantics=("parallel",),
            vmem_limit_bytes=VMEM_LIMIT_BYTES,
        ),
    )(*inputs)


def pallas_attention(q, k, v, h, *, probs_dtype=jnp.float32):
    """q, k, v: [B, S, d_model] (heads packed along the lane dim)."""
    B, S, d_model = q.shape
    d_k = d_model // h
    kern = functools.partial(_attention_kernel, h=h, d_k=d_k)
    spec = pl.BlockSpec((1, S, d_model), lambda b: (b, 0, 0))
    return _attention_call(kern, (q, k, v), B, S, d_model, h,
                           [spec, spec, spec], q.dtype, probs_dtype)


def pallas_attention_fused(qkv, h, *, probs_dtype=jnp.float32):
    """qkv: [B, S, 3*d_model] packed projections (self-attention fast path)."""
    B, S, d3 = qkv.shape
    d_model = d3 // 3
    d_k = d_model // h
    kern = functools.partial(_attention_kernel_fused, h=h, d_k=d_k)
    spec = pl.BlockSpec((1, S, d3), lambda b: (b, 0, 0))
    return _attention_call(kern, (qkv,), B, S, d_model, h,
                           [spec], qkv.dtype, probs_dtype)


# ----------------------------------------------------------------------------
# One-time parameter preparation (hoisted out of the forward):
#   * weights transposed to [Din, Dout] and cast to compute_dtype
#   * 1/sqrt(d_k) folded into the Q projection weight and bias
#   * fused QKV weight/bias concat built once
#   * biases kept in f32 (added in f32 inside the kernel)
# ----------------------------------------------------------------------------
def prepare_params(raw, h, *, compute_dtype=jnp.bfloat16):
    d_model = raw["wq"].shape[0]
    d_k = d_model // h
    scale = 1.0 / math.sqrt(d_k)

    def w_t(w):  # PyTorch [Dout, Din] -> [Din, Dout], cast once
        return jnp.asarray(w.T, dtype=compute_dtype)

    wq_s = raw["wq"] * scale
    bq_s = raw["bq"] * scale

    wq_t, wk_t, wv_t = w_t(wq_s), w_t(raw["wk"]), w_t(raw["wv"])
    return {
        "wq_t": wq_t, "bq": bq_s.astype(jnp.float32),
        "wk_t": wk_t, "bk": raw["bk"].astype(jnp.float32),
        "wv_t": wv_t, "bv": raw["bv"].astype(jnp.float32),
        "wo_t": w_t(raw["wo"]), "bo": raw["bo"].astype(jnp.float32),
        "wqkv_t": jnp.concatenate([wq_t, wk_t, wv_t], axis=1),
        "bqkv": jnp.concatenate(
            [bq_s, raw["bk"], raw["bv"]]).astype(jnp.float32),
    }


# ----------------------------------------------------------------------------
# MultiHeadedAttention forward (eval mode: dropout = identity, mask = None)
# ----------------------------------------------------------------------------
def multi_headed_attention(query, key, value, prep, h, *,
                           probs_dtype=jnp.float32):
    B, S, d_model = query.shape
    assert d_model % h == 0
    compute_dtype = prep["wq_t"].dtype

    xq = query.astype(compute_dtype).reshape(B * S, d_model)

    if (key is query) and (value is query):
        # Self-attention fast path: one fused QKV projection; its output goes
        # straight into the attention kernel (no XLA-side slices).
        qkv = pallas_linear(xq, prep["wqkv_t"], prep["bqkv"],
                            out_dtype=compute_dtype).reshape(B, S, 3 * d_model)
        ctx, attn = pallas_attention_fused(qkv, h, probs_dtype=probs_dtype)
    else:
        xk = key.astype(compute_dtype).reshape(B * S, d_model)
        xv = value.astype(compute_dtype).reshape(B * S, d_model)
        q = pallas_linear(xq, prep["wq_t"], prep["bq"],
                          out_dtype=compute_dtype).reshape(B, S, d_model)
        k = pallas_linear(xk, prep["wk_t"], prep["bk"],
                          out_dtype=compute_dtype).reshape(B, S, d_model)
        v = pallas_linear(xv, prep["wv_t"], prep["bv"],
                          out_dtype=compute_dtype).reshape(B, S, d_model)
        ctx, attn = pallas_attention(q, k, v, h, probs_dtype=probs_dtype)

    # ctx is already lane-dense [B, S, h*d_k] -> only a (free) reshape here.
    out = pallas_linear(ctx.reshape(B * S, d_model), prep["wo_t"], prep["bo"],
                        out_dtype=jnp.float32).reshape(B, S, d_model)
    return out, attn


# ----------------------------------------------------------------------------
# Deterministic parameter init (PyTorch Linear: U(-1/sqrt(fan_in), +1/sqrt(fan_in)))
# ----------------------------------------------------------------------------
def init_params(key, d_model):
    bound = 1.0 / math.sqrt(d_model)
    keys = jax.random.split(key, 8)
    names = ["wq", "bq", "wk", "bk", "wv", "bv", "wo", "bo"]
    params = {}
    for i, name in enumerate(names):
        shape = (d_model, d_model) if name.startswith("w") else (d_model,)
        params[name] = jax.random.uniform(
            keys[i], shape, minval=-bound, maxval=bound, dtype=jnp.float32
        )
    return params


if __name__ == "__main__":
    B, S, d_model, h = 2, 8, 32, 4
    d_k = d_model // h

    root = jax.random.PRNGKey(0)
    k_p, k_q, k_k, k_v = jax.random.split(root, 4)

    raw_params = init_params(k_p, d_model)
    query = jax.random.normal(k_q, (B, S, d_model), dtype=jnp.float32)
    key_in = jax.random.normal(k_k, (B, S, d_model), dtype=jnp.float32)
    value = jax.random.normal(k_v, (B, S, d_model), dtype=jnp.float32)

    # pure-JAX reference (matches the PyTorch module in eval mode)
    def ref(qx, kx, vx):
        def lin(x, w, b):
            return x @ w.T + b

        def split(x):
            return x.reshape(B, S, h, d_k).transpose(0, 2, 1, 3)

        qh = split(lin(qx, raw_params["wq"], raw_params["bq"]))
        kh = split(lin(kx, raw_params["wk"], raw_params["bk"]))
        vh = split(lin(vx, raw_params["wv"], raw_params["bv"]))
        scores = jnp.einsum("bhqd,bhkd->bhqk", qh, kh) / math.sqrt(d_k)
        p = jax.nn.softmax(scores, axis=-1)
        x = jnp.einsum("bhqk,bhkd->bhqd", p, vh)
        x = x.transpose(0, 2, 1, 3).reshape(B, S, d_model)
        return lin(x, raw_params["wo"], raw_params["bo"]), p

    out_ref_g, attn_ref_g = ref(query, key_in, value)
    out_ref_s, attn_ref_s = ref(query, query, query)

    # ---- f32 path: tight parity check ------------------------------------
    prep_f32 = prepare_params(raw_params, h, compute_dtype=jnp.float32)

    out, attn = multi_headed_attention(query, key_in, value, prep_f32, h)
    jax.block_until_ready((out, attn))
    assert out.shape == (B, S, d_model) and attn.shape == (B, h, S, S)
    assert jnp.allclose(out, out_ref_g, atol=1e-4, rtol=1e-4)
    assert jnp.allclose(attn, attn_ref_g, atol=1e-5, rtol=1e-5)

    out_s, attn_s = multi_headed_attention(query, query, query, prep_f32, h)
    jax.block_until_ready((out_s, attn_s))
    assert jnp.allclose(out_s, out_ref_s, atol=1e-4, rtol=1e-4)
    assert jnp.allclose(attn_s, attn_ref_s, atol=1e-5, rtol=1e-5)

    # ---- bf16 default path (MXU fast path): loose parity check ------------
    prep_bf16 = prepare_params(raw_params, h)   # compute_dtype=bfloat16 default

    out_b, attn_b = multi_headed_attention(query, key_in, value, prep_bf16, h)
    jax.block_until_ready((out_b, attn_b))
    assert jnp.allclose(out_b, out_ref_g, atol=1e-1, rtol=1e-1)
    assert jnp.allclose(attn_b, attn_ref_g, atol=1e-1, rtol=1e-1)

    out_bs, attn_bs = multi_headed_attention(query, query, query, prep_bf16, h)
    jax.block_until_ready((out_bs, attn_bs))
    assert jnp.allclose(out_bs, out_ref_s, atol=1e-1, rtol=1e-1)
    assert jnp.allclose(attn_bs, attn_ref_s, atol=1e-1, rtol=1e-1)

    print("KERNEL_OK")
</pallas_src>

<mosaic_0001>
module attributes {stable_mosaic.version = 11 : i64} {
  func.func @_linear_kernel(%arg0: i32, %arg1: i32, %arg2: i32, %arg3: memref<16x32xf32, #tpu.memory_space<vmem>>, %arg4: memref<32x32xf32, #tpu.memory_space<vmem>>, %arg5: memref<1x32xf32, #tpu.memory_space<vmem>>, %arg6: memref<16x32xf32, #tpu.memory_space<vmem>>, %arg7: memref<16x32xf32, #tpu.memory_space<vmem>>) attributes {dimension_semantics = [#tpu.dimension_semantics<parallel>, #tpu.dimension_semantics<parallel>, #tpu.dimension_semantics<arbitrary>], iteration_bounds = array<i64: 1, 1, 1>, scalar_prefetch = 0 : i64, scratch_operands = 1 : i64, tpu.core_type = #tpu.core_type<tc>, window_params = [{transform_indices = @transform_0, window_bounds = array<i64: 16, 32>}, {transform_indices = @transform_1, window_bounds = array<i64: 32, 32>}, {transform_indices = @transform_2, window_bounds = array<i64: 1, 32>}, {transform_indices = @transform_3, window_bounds = array<i64: 16, 32>}]} {
    %c0_i32 = arith.constant 0 : i32
    %0 = arith.cmpi eq, %arg2, %c0_i32 : i32
    %1 = arith.extui %0 : i1 to i32
    %c0_i32_0 = arith.constant 0 : i32
    %2 = arith.cmpi ne, %1, %c0_i32_0 : i32
    scf.if %2 {
      %cst_10 = arith.constant 0.000000e+00 : f32
      %12 = vector.broadcast %cst_10 : f32 to vector<16x32xf32>
      %c0_11 = arith.constant 0 : index
      %c0_12 = arith.constant 0 : index
      %13 = vector.load %arg7[%c0_11, %c0_12] : memref<16x32xf32, #tpu.memory_space<vmem>>, vector<16x32xf32>
      tpu.vector_store %arg7[%c0_11, %c0_12], %12 {strides = array<i32>} : memref<16x32xf32, #tpu.memory_space<vmem>>, vector<16x32xf32>,
    } else {
    }
    %c0 = arith.constant 0 : index
    %c0_1 = arith.constant 0 : index
    %3 = vector.load %arg7[%c0, %c0_1] : memref<16x32xf32, #tpu.memory_space<vmem>>, vector<16x32xf32>
    %c0_2 = arith.constant 0 : index
    %c0_3 = arith.constant 0 : index
    %4 = vector.load %arg3[%c0_2, %c0_3] : memref<16x32xf32, #tpu.memory_space<vmem>>, vector<16x32xf32>
    %c0_4 = arith.constant 0 : index
    %c0_5 = arith.constant 0 : index
    %5 = vector.load %arg4[%c0_4, %c0_5] : memref<32x32xf32, #tpu.memory_space<vmem>>, vector<32x32xf32>
    %cst = arith.constant dense<0.000000e+00> : vector<16x32xf32>
    %6 = tpu.matmul %4, %5, %cst {dimension_numbers = #tpu.dot_dimension_numbers<[1], [0], [0], [1], [0, 0, 1, 1], [], []>} : vector<16x32xf32>, vector<32x32xf32>, vector<16x32xf32> -> vector<16x32xf32>
    %7 = arith.addf %3, %6 : vector<16x32xf32>
    %c0_6 = arith.constant 0 : index
    %c0_7 = arith.constant 0 : index
    %8 = vector.load %arg7[%c0_6, %c0_7] : memref<16x32xf32, #tpu.memory_space<vmem>>, vector<16x32xf32>
    tpu.vector_store %arg7[%c0_6, %c0_7], %7 {strides = array<i32>} : memref<16x32xf32, #tpu.memory_space<vmem>>, vector<16x32xf32>,
    %c0_i32_8 = arith.constant 0 : i32
    %9 = arith.cmpi eq, %arg2, %c0_i32_8 : i32
    %10 = arith.extui %9 : i1 to i32
    %c0_i32_9 = arith.constant 0 : i32
    %11 = arith.cmpi ne, %10, %c0_i32_9 : i32
    scf.if %11 {
      %c0_10 = arith.constant 0 : index
      %c0_11 = arith.constant 0 : index
      %12 = vector.load %arg7[%c0_10, %c0_11] : memref<16x32xf32, #tpu.memory_space<vmem>>, vector<16x32xf32>
      %c0_12 = arith.constant 0 : index
      %c0_13 = arith.constant 0 : index
      %13 = vector.load %arg5[%c0_12, %c0_13] : memref<1x32xf32, #tpu.memory_space<vmem>>, vector<1x32xf32>
      %14 = vector.broadcast %13 : vector<1x32xf32> to vector<16x32xf32>
      %15 = arith.addf %12, %14 : vector<16x32xf32>
      %c0_14 = arith.constant 0 : index
      %c0_15 = arith.constant 0 : index
      %16 = vector.load %arg6[%c0_14, %c0_15] : memref<16x32xf32, #tpu.memory_space<vmem>>, vector<16x32xf32>
      tpu.vector_store %arg6[%c0_14, %c0_15], %15 {strides = array<i32>} : memref<16x32xf32, #tpu.memory_space<vmem>>, vector<16x32xf32>,
    } else {
    }
    return
  }
  func.func @transform_0(%arg0: i32, %arg1: i32, %arg2: i32) -> (i32, i32) {
    %c0_i32 = arith.constant 0 : i32
    return %arg0, %arg2 : i32, i32
  }
  func.func @transform_1(%arg0: i32, %arg1: i32, %arg2: i32) -> (i32, i32) {
    %c0_i32 = arith.constant 0 : i32
    return %arg2, %arg1 : i32, i32
  }
  func.func @transform_2(%arg0: i32, %arg1: i32, %arg2: i32) -> (i32, i32) {
    %c0_i32 = arith.constant 0 : i32
    %c0_i32_0 = arith.constant 0 : i32
    return %c0_i32, %arg1 : i32, i32
  }
  func.func @transform_3(%arg0: i32, %arg1: i32, %arg2: i32) -> (i32, i32) {
    %c0_i32 = arith.constant 0 : i32
    return %arg0, %arg1 : i32, i32
  }
}

</mosaic_0001>

<llo_original>
// kernel: tpu_custom_call.1
$region0: #{tpu_custom_call.1}
  #allocation0 [shape = 'u32[]', space=smem, size = 0x4, offset = 0x4, fixed_abs, tag = 'smem constant byte address 0x4 - core index']
  #allocation1 [shape = 'u32[72,128]{1,0:T(1,128)}', space=vmem, size = 0x9000, scoped, tag = 'internal scratch']
  #allocation2 [shape = 'f32[16,32]{1,0:T(8,128)}', space=vmem, size = 0x2000, scoped, tag = 'scratch operand']
  %s0 = inlined_call_operand.hbm [shape: f32[16,32], index: 0, kind: input, shape index: {}]
  %s1 = inlined_call_operand.hbm [shape: f32[32,32], index: 1, kind: input, shape index: {}]
  %s2 = inlined_call_operand.vmem [shape: f32[1,32], index: 2, kind: input, shape index: {}]
  %s3 = inlined_call_operand.hbm [shape: f32[16,32], index: 3, kind: output, shape index: {}]
  %s4 = sld [smem:[#allocation0]]
  $region38: #{tpu_custom_call.1} parent=0
    _
  %s6 = ssub.s32 1, %s4
  %s7 = scalar_select 0, %s6, %s4
  $region1: #{tpu_custom_call.1} parent=0
    #allocation3 [shape = 'u8[8192]{0}', space=vmem, size = 0x2000, scoped, tag = 'input window, operand 0, single buffered']
    #allocation4 [shape = 's32[1]{0}', space=sflag, size = 0x4, scoped, tag = 'scoped memory for tpu_custom_call.1']
    #allocation5 [shape = 's32[1]{0}', space=sflag, size = 0x4, scoped, tag = 'scoped memory for tpu_custom_call.1']
    #allocation6 [shape = 'u8[16384]{0}', space=vmem, size = 0x4000, scoped, tag = 'input window, operand 1, single buffered']
    #allocation7 [shape = 's32[1]{0}', space=sflag, size = 0x4, scoped, tag = 'scoped memory for tpu_custom_call.1']
    #allocation8 [shape = 'u8[8192]{0}', space=vmem, size = 0x2000, scoped, tag = 'output window, operand 0, single buffered']
    %8 = vsyncpa [#allocation4], 0
    %9 = vsyncpa [#allocation7], 0
    %10 = vsyncpa [#allocation5], 0
    // Predicated region
    $region2: #{tpu_custom_call.1} parent=1 // pred_check
      _
    $region3: #{tpu_custom_call.1} parent=1 // pred_check_branch
      %12 = sbr.rel (0) target = $region5
    $region4: #{tpu_custom_call.1} parent=1 // pred_region
      %14 = vsyncadd [#allocation4], 0
      %s15 = sshll.u32 %s0, 4
      %s16 = int_to_ptr.hbm [resolvable:$true] %s15
      %s17 = sshll.u32 [#allocation3], 4
      %s18 = int_to_ptr.vmem [resolvable:$true] %s17
      %23 = dma.hbm_to_vmem [thread:$0]  %s16, 256, %s18, [#allocation4], 128, 128, 8
    $region5: #{tpu_custom_call.1} parent=1 // pred_fallthru
      _
    // Predicated region
    $region6: #{tpu_custom_call.1} parent=1 // pred_check
      _
    $region7: #{tpu_custom_call.1} parent=1 // pred_check_branch
      %25 = sbr.rel (0) target = $region9
    $region8: #{tpu_custom_call.1} parent=1 // pred_region
      %27 = vsyncadd [#allocation7], 0
      %s28 = sshll.u32 %s1, 4
      %s29 = int_to_ptr.hbm [resolvable:$true] %s28
      %s30 = sshll.u32 [#allocation6], 4
      %s31 = int_to_ptr.vmem [resolvable:$true] %s30
      %36 = dma.hbm_to_vmem [thread:$0]  %s29, 512, %s31, [#allocation7], 128, 128, 8
    $region9: #{tpu_custom_call.1} parent=1 // pred_fallthru
      _
    // Predicated region
    $region10: #{tpu_custom_call.1} parent=1 // pred_check
      _
    $region11: #{tpu_custom_call.1} parent=1 // pred_check_branch
      %38 = sbr.rel (0) target = $region13
    $region12: #{tpu_custom_call.1} parent=1 // pred_region
      _
    $region13: #{tpu_custom_call.1} parent=1 // pred_fallthru
      _
    // Predicated region
    $region14: #{tpu_custom_call.1} parent=1 // pred_check
      _
    $region15: #{tpu_custom_call.1} parent=1 // pred_check_branch
      %40 = sbr.rel (0) target = $region17
    $region16: #{tpu_custom_call.1} parent=1 // pred_region
      %42 = dma.done [#allocation4], 256
    $region17: #{tpu_custom_call.1} parent=1 // pred_fallthru
      _
    // Predicated region
    $region18: #{tpu_custom_call.1} parent=1 // pred_check
      _
    $region19: #{tpu_custom_call.1} parent=1 // pred_check_branch
      %44 = sbr.rel (0) target = $region21
    $region20: #{tpu_custom_call.1} parent=1 // pred_region
      %46 = dma.done [#allocation7], 512
    $region21: #{tpu_custom_call.1} parent=1 // pred_fallthru
      _
    %p47 = scmp.eq.s32.totalorder 0, 0
    // Predicated region
    $region22: #{tpu_custom_call.1} parent=1 // pred_check
      %p48 = pneg %p47
    $region23: #{tpu_custom_call.1} parent=1 // pred_check_branch
      %50 = sbr.rel (%p48) target = $region25
    $region24: #{tpu_custom_call.1} parent=1 // pred_region
      %vm51 = vcmask 261120
      %52 = vst.msk [vmem:[#allocation2] sm:$0xff] %vm51, 0.0
      %53 = vst.msk [vmem:[#allocation2 + $0x8] sm:$0xff] %vm51, 0.0
    $region25: #{tpu_custom_call.1} parent=1 // pred_fallthru
      _
    %v54 = vld [vmem:[#allocation2] sm:$0xff]
    %v55 = vld [vmem:[#allocation2 + $0x8] sm:$0xff]
    %v56 = vld [vmem:[#allocation3] sm:$0xff]
    %v57 = vld [vmem:[#allocation3 + $0x8] sm:$0xff]
    %v58 = vld [vmem:[#allocation6] sm:$0xff]
    %v59 = vld [vmem:[#allocation6 + $0x8] sm:$0xff]
    %v60 = vld [vmem:[#allocation6 + $0x10] sm:$0xff]
    %v61 = vld [vmem:[#allocation6 + $0x18] sm:$0xff]
    %vm62 = vcmask 261120
    %v64 = vsel %vm62, %v56, 0
    %v67 = vsel %vm62, %v57, 0
    %69 = vmatpush.msra.mxu0 0.0
    %70 = vmatpush.msra.mxu0 0.0
    %71 = vmatpush.msra.mxu0 0.0
    %72 = vmatpush.msra.mxu0 0.0
    %73 = vmatpush.msra.mxu0 0.0
    %74 = vmatpush.msra.mxu0 0.0
    %75 = vmatpush.msra.mxu0 0.0
    %76 = vmatpush.msra.mxu0 0.0
    %77 = vmatpush.msra.mxu0 0.0
    %78 = vmatpush.msra.mxu0 0.0
    %79 = vmatpush.msra.mxu0 0.0
    %80 = vmatpush.msra.mxu0 0.0
    %81 = vmatpush.msra.mxu0 %v61
    %82 = vmatpush.msra.mxu0 %v60
    %83 = vmatpush.msra.mxu0 %v59
    %84 = vmatpush.msra.mxu0 %v58
    %85 = vmatmul.f32.gmra.mxu0 %v64
    %v86 = vpop.f32.mrf.mxu0
    %v87 = vadd.f32 0.0, %v86
    %88 = vmatmul.f32.gmra.mxu0 %v67
    %v89 = vpop.f32.mrf.mxu0
    %v90 = vadd.f32 0.0, %v89
    %91 = vdwg.mxu0
    %v92 = vadd.f32 %v54, %v87
    %v93 = vadd.f32 %v55, %v90
    %94 = vst.msk [vmem:[#allocation2] sm:$0xff] %vm62, %v92
    %95 = vst.msk [vmem:[#allocation2 + $0x8] sm:$0xff] %vm62, %v93
    // Predicated region
    $region26: #{tpu_custom_call.1} parent=1 // pred_check
      %p96 = pneg %p47
    $region27: #{tpu_custom_call.1} parent=1 // pred_check_branch
      %98 = sbr.rel (%p96) target = $region29
    $region28: #{tpu_custom_call.1} parent=1 // pred_region
      %v99 = vld [vmem:[#allocation2] sm:$0xff]
      %v100 = vld [vmem:[#allocation2 + $0x8] sm:$0xff]
      %v101 = vld [vmem:[%s2] sm:$0x1]
      %v103 = vperm.slane %v101, 0
      %v105 = vadd.f32 %v99, %v103
      %v106 = vadd.f32 %v100, %v103
      %107 = vst.msk [vmem:[#allocation8] sm:$0xff] %vm62, %v105
      %108 = vst.msk [vmem:[#allocation8 + $0x8] sm:$0xff] %vm62, %v106
    $region29: #{tpu_custom_call.1} parent=1 // pred_fallthru
      _
    // Predicated region
    $region30: #{tpu_custom_call.1} parent=1 // pred_check
      _
    $region31: #{tpu_custom_call.1} parent=1 // pred_check_branch
      %110 = sbr.rel (0) target = $region33
    $region32: #{tpu_custom_call.1} parent=1 // pred_region
      %112 = vsyncadd [#allocation5], 0
      %s113 = sshll.u32 [#allocation8], 4
      %s114 = int_to_ptr.vmem [resolvable:$true] %s113
      %s115 = sshll.u32 %s3, 4
      %s116 = int_to_ptr.hbm [resolvable:$true] %s115
      %121 = dma.vmem_to_hbm [thread:$0]  %s114, 256, %s116, [#allocation5], 128, 128, 8
    $region33: #{tpu_custom_call.1} parent=1 // pred_fallthru
      _
    // Predicated region
    $region34: #{tpu_custom_call.1} parent=1 // pred_check
      _
    $region35: #{tpu_custom_call.1} parent=1 // pred_check_branch
      %123 = sbr.rel (0) target = $region37
    $region36: #{tpu_custom_call.1} parent=1 // pred_region
      %125 = dma.done [#allocation5], 256
    $region37: #{tpu_custom_call.1} parent=1 // pred_fallthru
      _
    %126 = vsyncpa [#allocation4], 1
    %127 = vsyncpa [#allocation7], 1
    %128 = vsyncpa [#allocation5], 1

</llo_original>
